<compile_context>
chip_gen: v6e
topology: v6e:2x2x1
jax: 0.10.0
libtpu: 0.0.40
codegen_flags: <defaults>
</compile_context>

<pallas_src>
import functools

import numpy as np
import jax
import jax.numpy as jnp
from jax import lax
from jax.experimental import pallas as pl
from jax.experimental.pallas import tpu as pltpu


def _sepconv_kernel(x_ref, coef_ref, wbd_ref, out_ref, *, K, W, pad, use_mxu):
    # x_ref:    (bt*Cin, H*W)          activations, batch folded onto sublanes
    # coef_ref: (K*K, bt*Cin, H*W)     fused (tap value * boundary mask) per tap
    # wbd_ref:  (bt*Cout, bt*Cin)      block-diagonal pointwise weights kron(I_bt, Wpw)
    # out_ref:  (bt*Cout, H*W)         lane-dense output slab
    in_rows, HW = x_ref.shape
    out_rows = out_ref.shape[0]

    x = x_ref[...].astype(jnp.float32)                 # (bt*Cin, HW)

    # ---- depthwise KxK conv: per tap = 1 XLU roll + 1 VPU mul + 1 VPU add ----
    center = pad * K + pad
    acc = x * coef_ref[center]                         # center tap needs no shift
    for kh in range(K):
        for kw in range(K):
            kk = kh * K + kw
            if kk == center:
                continue
            d = (kh - pad) * W + (kw - pad)            # flat spatial offset of this tap
            # shifted[r, p] = x[r, (p + d) % HW]; wrapped/out-of-image lanes are zeroed
            # because the coefficient plane already carries the 0/1 boundary mask.
            shifted = pltpu.roll(x, shift=(-d) % HW, axis=1)
            acc = acc + shifted * coef_ref[kk]

    # ---- pointwise 1x1 conv ----
    if use_mxu:
        # One block-diagonal matmul per grid step keeps the MXU fed and stays in f32.
        out = jnp.dot(wbd_ref[...], acc, preferred_element_type=jnp.float32)
    else:
        # Tiny bt*Cin: a short exact-f32 outer-product MAC chain on the VPU.
        w = wbd_ref[...]
        out = jnp.zeros((out_rows, HW), jnp.float32)
        for j in range(in_rows):
            out = out + w[:, j:j + 1] * acc[j:j + 1, :]

    out_ref[...] = out.astype(out_ref.dtype)


def _tpu_info():
    """(physical VMEM bytes, whether one device hosts >1 TensorCore)."""
    vmem_cap = 64 << 20
    try:
        info = pltpu.get_tpu_info()
        cap = getattr(info, "vmem_capacity_bytes", None)
        if cap:
            vmem_cap = int(cap)
    except Exception:
        pass
    multi_core = True
    try:
        kind = jax.devices()[0].device_kind.lower()
        single_core = any(t in kind for t in ("v5 lite", "v5e", "v6 lite", "v6e", "v2", "v3"))
        multi_core = not single_core
    except Exception:
        pass
    return vmem_cap, multi_core


def _block_bytes(bt, cin, cout, hw, kk):
    # f32 working set per grid step: x + out (double-buffered), fused coef table
    # (scales with bt, double-buffered), plus acc/shifted temporaries.
    return 4 * hw * bt * (2 * cin + 2 * cout + 2 * kk * cin + 3 * cin)


def _pick_batch_tile(n, cin, cout, hw, kk, budget_bytes, prefer_multi_step):
    """Largest divisor of n with (8,128)-legal tiles that fits the VMEM budget."""
    def tile_legal(bt):
        in_ok = (bt * cin) % 8 == 0 or bt == n     # sublane dim: multiple of 8 or full
        out_ok = (bt * cout) % 8 == 0 or bt == n
        return in_ok and out_ok

    cands = [bt for bt in range(1, n + 1)
             if n % bt == 0 and tile_legal(bt)
             and _block_bytes(bt, cin, cout, hw, kk) <= budget_bytes]
    if not cands:
        cands = [bt for bt in range(1, n + 1) if n % bt == 0 and tile_legal(bt)]
    if prefer_multi_step:
        multi = [bt for bt in cands if n // bt >= 2]   # only worth it on multi-core chips
        if multi:
            return max(multi)
    return max(cands)


def separable_conv2d(x, w_dw, w_pw, *, padding=1):
    """x: (N, Cin, H, W); w_dw: (Cin, K, K) (or (Cin,1,K,K)); w_pw: (Cout, Cin) (or
    (Cout,Cin,1,1)). Returns (N, Cout, H, W)."""
    N, Cin, H, W = x.shape
    K = w_dw.shape[-1]
    Cout = w_pw.shape[0]
    HW = H * W
    KK = K * K
    assert K == 2 * padding + 1, "roll-based same-size depthwise assumes K == 2*padding+1"

    # ---- per-tap boundary-validity masks (static, tiny) ----
    yy, xx = np.meshgrid(np.arange(H), np.arange(W), indexing="ij")
    rows = []
    for kh in range(K):
        for kw in range(K):
            dh, dw = kh - padding, kw - padding
            valid = ((yy + dh >= 0) & (yy + dh < H) & (xx + dw >= 0) & (xx + dw < W))
            rows.append(valid.reshape(HW))
    mask = jnp.asarray(np.stack(rows).astype(np.float32))            # (KK, HW)

    vmem_cap, multi_core = _tpu_info()
    bt = _pick_batch_tile(N, Cin, Cout, HW, KK, vmem_cap // 4, multi_core)
    use_mxu = bt * Cin > 16      # tiny contractions stay on the VPU (exact f32)

    # ---- constants: fuse tap*mask once, tile along the batch-on-sublane axis ----
    wdw_taps = w_dw.reshape(Cin, KK).astype(jnp.float32)             # (Cin, KK)
    coef = wdw_taps.T[:, :, None] * mask[:, None, :]                 # (KK, Cin, HW)
    coef = jnp.tile(coef, (1, bt, 1))                                # (KK, bt*Cin, HW)
    wpw2 = w_pw.reshape(Cout, Cin).astype(jnp.float32)
    wbd = jnp.kron(jnp.eye(bt, dtype=jnp.float32), wpw2)             # (bt*Cout, bt*Cin)

    x2d = x.reshape(N * Cin, HW)                                     # metadata-only

    kernel = functools.partial(_sepconv_kernel, K=K, W=W, pad=padding, use_mxu=use_mxu)

    blk = _block_bytes(bt, Cin, Cout, HW, KK)
    vmem_limit = int(min(max(32 << 20, 2 * blk), max(32 << 20, vmem_cap // 2)))

    out2d = pl.pallas_call(
        kernel,
        out_shape=jax.ShapeDtypeStruct((N * Cout, HW), x.dtype),
        grid_spec=pltpu.PrefetchScalarGridSpec(
            num_scalar_prefetch=0,
            grid=(N // bt,),
            in_specs=[
                pl.BlockSpec((bt * Cin, HW), lambda n: (n, 0)),
                pl.BlockSpec((KK, bt * Cin, HW), lambda n: (0, 0, 0)),   # grid-invariant
                pl.BlockSpec((bt * Cout, bt * Cin), lambda n: (0, 0)),   # grid-invariant
            ],
            out_specs=pl.BlockSpec((bt * Cout, HW), lambda n: (n, 0)),
        ),
        compiler_params=pltpu.CompilerParams(
            dimension_semantics=("parallel",),
            vmem_limit_bytes=vmem_limit,
        ),
    )(x2d, coef, wbd)

    return out2d.reshape(N, Cout, H, W)


if __name__ == "__main__":
    N, Cin, Cout, H, W, K = 2, 4, 8, 16, 16, 3

    key = jax.random.PRNGKey(0)
    kx, kd, kp = jax.random.split(key, 3)
    x = jax.random.normal(kx, (N, Cin, H, W), dtype=jnp.float32)
    # depthwise weight: PyTorch shape (Cin, 1, K, K) -> stored as (Cin, K, K)
    w_dw = jax.random.normal(kd, (Cin, K, K), dtype=jnp.float32) * 0.1
    # pointwise weight: PyTorch shape (Cout, Cin, 1, 1) -> stored as (Cout, Cin)
    w_pw = jax.random.normal(kp, (Cout, Cin), dtype=jnp.float32) * 0.1

    out = jax.block_until_ready(separable_conv2d(x, w_dw, w_pw))

    # Pure-JAX reference (same semantics as the PyTorch module)
    dw_ref = lax.conv_general_dilated(
        x, w_dw.reshape(Cin, 1, K, K), window_strides=(1, 1),
        padding=((1, 1), (1, 1)), feature_group_count=Cin,
        dimension_numbers=("NCHW", "OIHW", "NCHW"))
    ref = lax.conv_general_dilated(
        dw_ref, w_pw.reshape(Cout, Cin, 1, 1), window_strides=(1, 1),
        padding="VALID", dimension_numbers=("NCHW", "OIHW", "NCHW"))

    assert out.shape == (N, Cout, H, W)
    assert jnp.allclose(out, ref, atol=1e-4, rtol=1e-4), float(jnp.max(jnp.abs(out - ref)))
    print("KERNEL_OK")
</pallas_src>

<mosaic_0001>
module attributes {stable_mosaic.version = 11 : i64} {
  func.func @_sepconv_kernel(%arg0: i32, %arg1: memref<8x256xf32, #tpu.memory_space<vmem>>, %arg2: memref<9x8x256xf32, #tpu.memory_space<vmem>>, %arg3: memref<16x8xf32, #tpu.memory_space<vmem>>, %arg4: memref<16x256xf32, #tpu.memory_space<vmem>>) attributes {dimension_semantics = [#tpu.dimension_semantics<parallel>], iteration_bounds = array<i64: 1>, scalar_prefetch = 0 : i64, scratch_operands = 0 : i64, tpu.core_type = #tpu.core_type<tc>, window_params = [{transform_indices = @transform_0, window_bounds = array<i64: 8, 256>}, {pipeline_mode = #tpu.pipeline_mode<synchronous>, transform_indices = @transform_1, window_bounds = array<i64: 9, 8, 256>}, {pipeline_mode = #tpu.pipeline_mode<synchronous>, transform_indices = @transform_2, window_bounds = array<i64: 16, 8>}, {transform_indices = @transform_3, window_bounds = array<i64: 16, 256>}]} {
    %c0 = arith.constant 0 : index
    %c0_0 = arith.constant 0 : index
    %0 = vector.load %arg1[%c0, %c0_0] : memref<8x256xf32, #tpu.memory_space<vmem>>, vector<8x256xf32>
    %c4 = arith.constant 4 : index
    %c0_1 = arith.constant 0 : index
    %c0_2 = arith.constant 0 : index
    %1 = vector.load %arg2[%c4, %c0_1, %c0_2] : memref<9x8x256xf32, #tpu.memory_space<vmem>>, vector<1x8x256xf32>
    %2 = vector.shape_cast %1 : vector<1x8x256xf32> to vector<8x256xf32>
    %3 = arith.mulf %0, %2 : vector<8x256xf32>
    %c17_i32 = arith.constant 17 : i32
    %4 = tpu.dynamic_rotate %0 by %c17_i32 dim 1 : vector<8x256xf32>, i32 -> vector<8x256xf32>
    %c0_3 = arith.constant 0 : index
    %c0_4 = arith.constant 0 : index
    %c0_5 = arith.constant 0 : index
    %5 = vector.load %arg2[%c0_3, %c0_4, %c0_5] : memref<9x8x256xf32, #tpu.memory_space<vmem>>, vector<1x8x256xf32>
    %6 = vector.shape_cast %5 : vector<1x8x256xf32> to vector<8x256xf32>
    %7 = arith.mulf %4, %6 : vector<8x256xf32>
    %8 = arith.addf %3, %7 : vector<8x256xf32>
    %c16_i32 = arith.constant 16 : i32
    %9 = tpu.dynamic_rotate %0 by %c16_i32 dim 1 : vector<8x256xf32>, i32 -> vector<8x256xf32>
    %c1 = arith.constant 1 : index
    %c0_6 = arith.constant 0 : index
    %c0_7 = arith.constant 0 : index
    %10 = vector.load %arg2[%c1, %c0_6, %c0_7] : memref<9x8x256xf32, #tpu.memory_space<vmem>>, vector<1x8x256xf32>
    %11 = vector.shape_cast %10 : vector<1x8x256xf32> to vector<8x256xf32>
    %12 = arith.mulf %9, %11 : vector<8x256xf32>
    %13 = arith.addf %8, %12 : vector<8x256xf32>
    %c15_i32 = arith.constant 15 : i32
    %14 = tpu.dynamic_rotate %0 by %c15_i32 dim 1 : vector<8x256xf32>, i32 -> vector<8x256xf32>
    %c2 = arith.constant 2 : index
    %c0_8 = arith.constant 0 : index
    %c0_9 = arith.constant 0 : index
    %15 = vector.load %arg2[%c2, %c0_8, %c0_9] : memref<9x8x256xf32, #tpu.memory_space<vmem>>, vector<1x8x256xf32>
    %16 = vector.shape_cast %15 : vector<1x8x256xf32> to vector<8x256xf32>
    %17 = arith.mulf %14, %16 : vector<8x256xf32>
    %18 = arith.addf %13, %17 : vector<8x256xf32>
    %c1_i32 = arith.constant 1 : i32
    %19 = tpu.dynamic_rotate %0 by %c1_i32 dim 1 : vector<8x256xf32>, i32 -> vector<8x256xf32>
    %c3 = arith.constant 3 : index
    %c0_10 = arith.constant 0 : index
    %c0_11 = arith.constant 0 : index
    %20 = vector.load %arg2[%c3, %c0_10, %c0_11] : memref<9x8x256xf32, #tpu.memory_space<vmem>>, vector<1x8x256xf32>
    %21 = vector.shape_cast %20 : vector<1x8x256xf32> to vector<8x256xf32>
    %22 = arith.mulf %19, %21 : vector<8x256xf32>
    %23 = arith.addf %18, %22 : vector<8x256xf32>
    %c255_i32 = arith.constant 255 : i32
    %24 = tpu.dynamic_rotate %0 by %c255_i32 dim 1 : vector<8x256xf32>, i32 -> vector<8x256xf32>
    %c5 = arith.constant 5 : index
    %c0_12 = arith.constant 0 : index
    %c0_13 = arith.constant 0 : index
    %25 = vector.load %arg2[%c5, %c0_12, %c0_13] : memref<9x8x256xf32, #tpu.memory_space<vmem>>, vector<1x8x256xf32>
    %26 = vector.shape_cast %25 : vector<1x8x256xf32> to vector<8x256xf32>
    %27 = arith.mulf %24, %26 : vector<8x256xf32>
    %28 = arith.addf %23, %27 : vector<8x256xf32>
    %c241_i32 = arith.constant 241 : i32
    %29 = tpu.dynamic_rotate %0 by %c241_i32 dim 1 : vector<8x256xf32>, i32 -> vector<8x256xf32>
    %c6 = arith.constant 6 : index
    %c0_14 = arith.constant 0 : index
    %c0_15 = arith.constant 0 : index
    %30 = vector.load %arg2[%c6, %c0_14, %c0_15] : memref<9x8x256xf32, #tpu.memory_space<vmem>>, vector<1x8x256xf32>
    %31 = vector.shape_cast %30 : vector<1x8x256xf32> to vector<8x256xf32>
    %32 = arith.mulf %29, %31 : vector<8x256xf32>
    %33 = arith.addf %28, %32 : vector<8x256xf32>
    %c240_i32 = arith.constant 240 : i32
    %34 = tpu.dynamic_rotate %0 by %c240_i32 dim 1 : vector<8x256xf32>, i32 -> vector<8x256xf32>
    %c7 = arith.constant 7 : index
    %c0_16 = arith.constant 0 : index
    %c0_17 = arith.constant 0 : index
    %35 = vector.load %arg2[%c7, %c0_16, %c0_17] : memref<9x8x256xf32, #tpu.memory_space<vmem>>, vector<1x8x256xf32>
    %36 = vector.shape_cast %35 : vector<1x8x256xf32> to vector<8x256xf32>
    %37 = arith.mulf %34, %36 : vector<8x256xf32>
    %38 = arith.addf %33, %37 : vector<8x256xf32>
    %c239_i32 = arith.constant 239 : i32
    %39 = tpu.dynamic_rotate %0 by %c239_i32 dim 1 : vector<8x256xf32>, i32 -> vector<8x256xf32>
    %c8 = arith.constant 8 : index
    %c0_18 = arith.constant 0 : index
    %c0_19 = arith.constant 0 : index
    %40 = vector.load %arg2[%c8, %c0_18, %c0_19] : memref<9x8x256xf32, #tpu.memory_space<vmem>>, vector<1x8x256xf32>
    %41 = vector.shape_cast %40 : vector<1x8x256xf32> to vector<8x256xf32>
    %42 = arith.mulf %39, %41 : vector<8x256xf32>
    %43 = arith.addf %38, %42 : vector<8x256xf32>
    %c0_20 = arith.constant 0 : index
    %c0_21 = arith.constant 0 : index
    %44 = vector.load %arg3[%c0_20, %c0_21] : memref<16x8xf32, #tpu.memory_space<vmem>>, vector<16x8xf32>
    %cst = arith.constant 0.000000e+00 : f32
    %45 = vector.broadcast %cst : f32 to vector<16x256xf32>
    %46 = vector.extract_strided_slice %44 {offsets = [0, 0], sizes = [16, 1], strides = [1, 1]} : vector<16x8xf32> to vector<16x1xf32>
    %47 = vector.extract_strided_slice %43 {offsets = [0, 0], sizes = [1, 256], strides = [1, 1]} : vector<8x256xf32> to vector<1x256xf32>
    %48 = vector.broadcast %46 : vector<16x1xf32> to vector<16x256xf32>
    %49 = vector.broadcast %47 : vector<1x256xf32> to vector<16x256xf32>
    %50 = arith.mulf %48, %49 : vector<16x256xf32>
    %51 = arith.addf %45, %50 : vector<16x256xf32>
    %52 = vector.extract_strided_slice %44 {offsets = [0, 1], sizes = [16, 1], strides = [1, 1]} : vector<16x8xf32> to vector<16x1xf32>
    %53 = vector.extract_strided_slice %43 {offsets = [1, 0], sizes = [1, 256], strides = [1, 1]} : vector<8x256xf32> to vector<1x256xf32>
    %54 = vector.broadcast %52 : vector<16x1xf32> to vector<16x256xf32>
    %55 = vector.broadcast %53 : vector<1x256xf32> to vector<16x256xf32>
    %56 = arith.mulf %54, %55 : vector<16x256xf32>
    %57 = arith.addf %51, %56 : vector<16x256xf32>
    %58 = vector.extract_strided_slice %44 {offsets = [0, 2], sizes = [16, 1], strides = [1, 1]} : vector<16x8xf32> to vector<16x1xf32>
    %59 = vector.extract_strided_slice %43 {offsets = [2, 0], sizes = [1, 256], strides = [1, 1]} : vector<8x256xf32> to vector<1x256xf32>
    %60 = vector.broadcast %58 : vector<16x1xf32> to vector<16x256xf32>
    %61 = vector.broadcast %59 : vector<1x256xf32> to vector<16x256xf32>
    %62 = arith.mulf %60, %61 : vector<16x256xf32>
    %63 = arith.addf %57, %62 : vector<16x256xf32>
    %64 = vector.extract_strided_slice %44 {offsets = [0, 3], sizes = [16, 1], strides = [1, 1]} : vector<16x8xf32> to vector<16x1xf32>
    %65 = vector.extract_strided_slice %43 {offsets = [3, 0], sizes = [1, 256], strides = [1, 1]} : vector<8x256xf32> to vector<1x256xf32>
    %66 = vector.broadcast %64 : vector<16x1xf32> to vector<16x256xf32>
    %67 = vector.broadcast %65 : vector<1x256xf32> to vector<16x256xf32>
    %68 = arith.mulf %66, %67 : vector<16x256xf32>
    %69 = arith.addf %63, %68 : vector<16x256xf32>
    %70 = vector.extract_strided_slice %44 {offsets = [0, 4], sizes = [16, 1], strides = [1, 1]} : vector<16x8xf32> to vector<16x1xf32>
    %71 = vector.extract_strided_slice %43 {offsets = [4, 0], sizes = [1, 256], strides = [1, 1]} : vector<8x256xf32> to vector<1x256xf32>
    %72 = vector.broadcast %70 : vector<16x1xf32> to vector<16x256xf32>
    %73 = vector.broadcast %71 : vector<1x256xf32> to vector<16x256xf32>
    %74 = arith.mulf %72, %73 : vector<16x256xf32>
    %75 = arith.addf %69, %74 : vector<16x256xf32>
    %76 = vector.extract_strided_slice %44 {offsets = [0, 5], sizes = [16, 1], strides = [1, 1]} : vector<16x8xf32> to vector<16x1xf32>
    %77 = vector.extract_strided_slice %43 {offsets = [5, 0], sizes = [1, 256], strides = [1, 1]} : vector<8x256xf32> to vector<1x256xf32>
    %78 = vector.broadcast %76 : vector<16x1xf32> to vector<16x256xf32>
    %79 = vector.broadcast %77 : vector<1x256xf32> to vector<16x256xf32>
    %80 = arith.mulf %78, %79 : vector<16x256xf32>
    %81 = arith.addf %75, %80 : vector<16x256xf32>
    %82 = vector.extract_strided_slice %44 {offsets = [0, 6], sizes = [16, 1], strides = [1, 1]} : vector<16x8xf32> to vector<16x1xf32>
    %83 = vector.extract_strided_slice %43 {offsets = [6, 0], sizes = [1, 256], strides = [1, 1]} : vector<8x256xf32> to vector<1x256xf32>
    %84 = vector.broadcast %82 : vector<16x1xf32> to vector<16x256xf32>
    %85 = vector.broadcast %83 : vector<1x256xf32> to vector<16x256xf32>
    %86 = arith.mulf %84, %85 : vector<16x256xf32>
    %87 = arith.addf %81, %86 : vector<16x256xf32>
    %88 = vector.extract_strided_slice %44 {offsets = [0, 7], sizes = [16, 1], strides = [1, 1]} : vector<16x8xf32> to vector<16x1xf32>
    %89 = vector.extract_strided_slice %43 {offsets = [7, 0], sizes = [1, 256], strides = [1, 1]} : vector<8x256xf32> to vector<1x256xf32>
    %90 = vector.broadcast %88 : vector<16x1xf32> to vector<16x256xf32>
    %91 = vector.broadcast %89 : vector<1x256xf32> to vector<16x256xf32>
    %92 = arith.mulf %90, %91 : vector<16x256xf32>
    %93 = arith.addf %87, %92 : vector<16x256xf32>
    %c0_22 = arith.constant 0 : index
    %c0_23 = arith.constant 0 : index
    %94 = vector.load %arg4[%c0_22, %c0_23] : memref<16x256xf32, #tpu.memory_space<vmem>>, vector<16x256xf32>
    tpu.vector_store %arg4[%c0_22, %c0_23], %93 {strides = array<i32>} : memref<16x256xf32, #tpu.memory_space<vmem>>, vector<16x256xf32>,
    return
  }
  func.func @transform_0(%arg0: i32) -> (i32, i32) {
    %c0_i32 = arith.constant 0 : i32
    %c0_i32_0 = arith.constant 0 : i32
    return %arg0, %c0_i32 : i32, i32
  }
  func.func @transform_1(%arg0: i32) -> (i32, i32, i32) {
    %c0_i32 = arith.constant 0 : i32
    %c0_i32_0 = arith.constant 0 : i32
    %c0_i32_1 = arith.constant 0 : i32
    %c0_i32_2 = arith.constant 0 : i32
    return %c0_i32, %c0_i32_0, %c0_i32_1 : i32, i32, i32
  }
  func.func @transform_2(%arg0: i32) -> (i32, i32) {
    %c0_i32 = arith.constant 0 : i32
    %c0_i32_0 = arith.constant 0 : i32
    %c0_i32_1 = arith.constant 0 : i32
    return %c0_i32, %c0_i32_0 : i32, i32
  }
  func.func @transform_3(%arg0: i32) -> (i32, i32) {
    %c0_i32 = arith.constant 0 : i32
    %c0_i32_0 = arith.constant 0 : i32
    return %arg0, %c0_i32 : i32, i32
  }
}

</mosaic_0001>

<llo_original>
// kernel: tpu_custom_call.1
$region0: #{tpu_custom_call.1}
  #allocation0 [shape = 'u32[]', space=smem, size = 0x4, offset = 0x4, fixed_abs, tag = 'smem constant byte address 0x4 - core index']
  #allocation1 [shape = 'u32[144,128]{1,0:T(1,128)}', space=vmem, size = 0x12000, scoped, tag = 'internal scratch']
  %s0 = inlined_call_operand.vmem [shape: f32[8,256], index: 0, kind: input, shape index: {}]
  %s1 = inlined_call_operand.hbm [shape: f32[9,8,256], index: 1, kind: input, shape index: {}]
  %s2 = inlined_call_operand.vmem [shape: f32[16,8], index: 2, kind: input, shape index: {}]
  %s3 = inlined_call_operand.hbm [shape: f32[16,256], index: 3, kind: output, shape index: {}]
  %s4 = sld [smem:[#allocation0]]
  $region26: #{tpu_custom_call.1} parent=0
    _
  %s6 = ssub.s32 1, %s4
  %s7 = scalar_select 0, %s6, %s4
  $region1: #{tpu_custom_call.1} parent=0
    #allocation2 [shape = 'u8[73728]{0}', space=vmem, size = 0x12000, scoped, tag = 'input window, operand 1, single buffered']
    #allocation3 [shape = 's32[1]{0}', space=sflag, size = 0x4, scoped, tag = 'scoped memory for tpu_custom_call.1']
    #allocation4 [shape = 's32[1]{0}', space=sflag, size = 0x4, scoped, tag = 'scoped memory for tpu_custom_call.1']
    #allocation5 [shape = 'u8[16384]{0}', space=vmem, size = 0x4000, scoped, tag = 'output window, operand 0, single buffered']
    %8 = vsyncpa [#allocation3], 0
    %9 = vsyncpa [#allocation4], 0
    // Predicated region
    $region2: #{tpu_custom_call.1} parent=1 // pred_check
      _
    $region3: #{tpu_custom_call.1} parent=1 // pred_check_branch
      %11 = sbr.rel (0) target = $region5
    $region4: #{tpu_custom_call.1} parent=1 // pred_region
      _
    $region5: #{tpu_custom_call.1} parent=1 // pred_fallthru
      _
    // Predicated region
    $region6: #{tpu_custom_call.1} parent=1 // pred_check
      _
    $region7: #{tpu_custom_call.1} parent=1 // pred_check_branch
      %13 = sbr.rel (0) target = $region9
    $region8: #{tpu_custom_call.1} parent=1 // pred_region
      %s15 = ssub.s32 2304, 2304
      %16 = vsyncadd [#allocation3], %s15
      %s17 = sshll.u32 [#allocation2], 4
      %s18 = int_to_ptr.vmem [resolvable:$true] %s17
      %23 = dma.hbm_to_vmem [thread:$0]  %s1, 2304, %s18, [#allocation3], 256, 256, 16
    $region9: #{tpu_custom_call.1} parent=1 // pred_fallthru
      _
    // Predicated region
    $region10: #{tpu_custom_call.1} parent=1 // pred_check
      _
    $region11: #{tpu_custom_call.1} parent=1 // pred_check_branch
      %25 = sbr.rel (0) target = $region13
    $region12: #{tpu_custom_call.1} parent=1 // pred_region
      _
    $region13: #{tpu_custom_call.1} parent=1 // pred_fallthru
      _
    // Predicated region
    $region14: #{tpu_custom_call.1} parent=1 // pred_check
      _
    $region15: #{tpu_custom_call.1} parent=1 // pred_check_branch
      %27 = sbr.rel (0) target = $region17
    $region16: #{tpu_custom_call.1} parent=1 // pred_region
      %28 = dma.done [#allocation3], 2304
    $region17: #{tpu_custom_call.1} parent=1 // pred_fallthru
      _
    %v29 = vld [vmem:[%s0] sm:$0xff]
    %v30 = vld [vmem:[%s0 + $0x8] sm:$0xff]
    %s31 = scalar_lea.vmem [#allocation2], 64
    %v32 = vld [vmem:[%s31] sm:$0xff]
    %v33 = vld [vmem:[%s31 + $0x8] sm:$0xff]
    %v34 = vmul.f32 %v29, %v32
    %v35 = vmul.f32 %v30, %v33
    %36 = vrot.lane.b32.xlu0 %v29, 17
    %v37 = vpop.permute.xlu0 %36
    %38 = vrot.lane.b32.xlu0 %v30, 17
    %v39 = vpop.permute.xlu0 %38
    %v40 = vlaneseq
    %v41 = vand.u32 %v40, 127
    %vm42 = vcmp.lt.s32.totalorder %v41, 17
    %v43 = vsel %vm42, %v37, %v39
    %v44 = vsel %vm42, %v39, %v37
    %v45 = vld [vmem:[#allocation2] sm:$0xff]
    %v46 = vld [vmem:[#allocation2 + $0x8] sm:$0xff]
    %v47 = vmul.f32 %v44, %v45
    %v48 = vmul.f32 %v43, %v46
    %v49 = vadd.f32 %v34, %v47
    %v50 = vadd.f32 %v35, %v48
    %51 = vrot.lane.b32.xlu0 %v29, 16
    %v52 = vpop.permute.xlu0 %51
    %53 = vrot.lane.b32.xlu0 %v30, 16
    %v54 = vpop.permute.xlu0 %53
    %vm55 = vcmp.lt.s32.totalorder %v41, 16
    %v56 = vsel %vm55, %v52, %v54
    %v57 = vsel %vm55, %v54, %v52
    %s58 = scalar_lea.vmem [#allocation2], 16
    %v59 = vld [vmem:[%s58] sm:$0xff]
    %v60 = vld [vmem:[%s58 + $0x8] sm:$0xff]
    %v61 = vmul.f32 %v57, %v59
    %v62 = vmul.f32 %v56, %v60
    %v63 = vadd.f32 %v49, %v61
    %v64 = vadd.f32 %v50, %v62
    %65 = vrot.lane.b32.xlu0 %v29, 15
    %v66 = vpop.permute.xlu0 %65
    %67 = vrot.lane.b32.xlu0 %v30, 15
    %v68 = vpop.permute.xlu0 %67
    %vm69 = vcmp.lt.s32.totalorder %v41, 15
    %v70 = vsel %vm69, %v66, %v68
    %v71 = vsel %vm69, %v68, %v66
    %s72 = scalar_lea.vmem [#allocation2], 32
    %v73 = vld [vmem:[%s72] sm:$0xff]
    %v74 = vld [vmem:[%s72 + $0x8] sm:$0xff]
    %v75 = vmul.f32 %v71, %v73
    %v76 = vmul.f32 %v70, %v74
    %v77 = vadd.f32 %v63, %v75
    %v78 = vadd.f32 %v64, %v76
    %79 = vrot.lane.b32.xlu0 %v29, 1
    %v80 = vpop.permute.xlu0 %79
    %81 = vrot.lane.b32.xlu0 %v30, 1
    %v82 = vpop.permute.xlu0 %81
    %vm83 = vcmp.lt.s32.totalorder %v41, 1
    %v84 = vsel %vm83, %v80, %v82
    %v85 = vsel %vm83, %v82, %v80
    %s86 = scalar_lea.vmem [#allocation2], 48
    %v87 = vld [vmem:[%s86] sm:$0xff]
    %v88 = vld [vmem:[%s86 + $0x8] sm:$0xff]
    %v89 = vmul.f32 %v85, %v87
    %v90 = vmul.f32 %v84, %v88
    %v91 = vadd.f32 %v77, %v89
    %v92 = vadd.f32 %v78, %v90
    %93 = vrot.lane.b32.xlu0 %v29, 127
    %v94 = vpop.permute.xlu0 %93
    %95 = vrot.lane.b32.xlu0 %v30, 127
    %v96 = vpop.permute.xlu0 %95
    %vm97 = vcmp.lt.s32.totalorder %v41, 127
    %v98 = vsel %vm97, %v94, %v96
    %v99 = vsel %vm97, %v96, %v94
    %s100 = scalar_lea.vmem [#allocation2], 80
    %v101 = vld [vmem:[%s100] sm:$0xff]
    %v102 = vld [vmem:[%s100 + $0x8] sm:$0xff]
    %v103 = vmul.f32 %v98, %v101
    %v104 = vmul.f32 %v99, %v102
    %v105 = vadd.f32 %v91, %v103
    %v106 = vadd.f32 %v92, %v104
    %107 = vrot.lane.b32.xlu0 %v29, 113
    %v108 = vpop.permute.xlu0 %107
    %109 = vrot.lane.b32.xlu0 %v30, 113
    %v110 = vpop.permute.xlu0 %109
    %vm111 = vcmp.lt.s32.totalorder %v41, 113
    %v112 = vsel %vm111, %v108, %v110
    %v113 = vsel %vm111, %v110, %v108
    %s114 = scalar_lea.vmem [#allocation2], 96
    %v115 = vld [vmem:[%s114] sm:$0xff]
    %v116 = vld [vmem:[%s114 + $0x8] sm:$0xff]
    %v117 = vmul.f32 %v112, %v115
    %v118 = vmul.f32 %v113, %v116
    %v119 = vadd.f32 %v105, %v117
    %v120 = vadd.f32 %v106, %v118
    %121 = vrot.lane.b32.xlu0 %v29, 112
    %v122 = vpop.permute.xlu0 %121
    %123 = vrot.lane.b32.xlu0 %v30, 112
    %v124 = vpop.permute.xlu0 %123
    %vm125 = vcmp.lt.s32.totalorder %v41, 112
    %v126 = vsel %vm125, %v122, %v124
    %v127 = vsel %vm125, %v124, %v122
    %s128 = scalar_lea.vmem [#allocation2], 112
    %v129 = vld [vmem:[%s128] sm:$0xff]
    %v130 = vld [vmem:[%s128 + $0x8] sm:$0xff]
    %v131 = vmul.f32 %v126, %v129
    %v132 = vmul.f32 %v127, %v130
    %v133 = vadd.f32 %v119, %v131
    %v134 = vadd.f32 %v120, %v132
    %135 = vrot.lane.b32.xlu0 %v29, 111
    %v136 = vpop.permute.xlu0 %135
    %137 = vrot.lane.b32.xlu0 %v30, 111
    %v138 = vpop.permute.xlu0 %137
    %vm139 = vcmp.lt.s32.totalorder %v41, 111
    %v140 = vsel %vm139, %v136, %v138
    %v141 = vsel %vm139, %v138, %v136
    %s142 = scalar_lea.vmem [#allocation2], 128
    %v143 = vld [vmem:[%s142] sm:$0xff]
    %v144 = vld [vmem:[%s142 + $0x8] sm:$0xff]
    %v145 = vmul.f32 %v140, %v143
    %v146 = vmul.f32 %v141, %v144
    %v147 = vadd.f32 %v133, %v145
    %v148 = vadd.f32 %v134, %v146
    %v149 = vld [vmem:[%s2] sm:$0xff]
    %v150 = vld [vmem:[%s2 + $0x8] sm:$0xff]
    %152 = vset.pattern.permute.xlu0 0
    %153 = vperm.xlu0 %152, %v149
    %v154 = vpop.permute.xlu0 %153
    %157 = vset.pattern.permute.xlu0 0
    %158 = vperm.xlu0 %157, %v150
    %v159 = vpop.permute.xlu0 %158
    %v161 = vlaneseq
    %v162 = vshrl.u32 %v161, 7
    %v163 = vsub.s32 0, %v162
    %v164 = vrot.slane %v147, %v163
    %v165 = vlaneseq
    %v166 = vshrl.u32 %v165, 7
    %v167 = vsub.s32 0, %v166
    %v168 = vrot.slane %v148, %v167
    %v169 = vmul.f32 %v154, %v164
    %v170 = vmul.f32 %v154, %v168
    %v171 = vmul.f32 %v159, %v164
    %v172 = vmul.f32 %v159, %v168
    %v173 = vadd.f32 %v169, 0.0
    %v174 = vadd.f32 %v170, 0.0
    %v175 = vadd.f32 %v171, 0.0
    %v176 = vadd.f32 %v172, 0.0
    %177 = vset.pattern.permute.xlu0 1
    %178 = vperm.xlu0 %177, %v149
    %v179 = vpop.permute.xlu0 %178
    %181 = vset.pattern.permute.xlu0 1
    %182 = vperm.xlu0 %181, %v150
    %v183 = vpop.permute.xlu0 %182
    %v185 = vlaneseq
    %v186 = vshrl.u32 %v185, 7
    %v187 = vsub.s32 1, %v186
    %v188 = vrot.slane %v147, %v187
    %v189 = vlaneseq
    %v190 = vshrl.u32 %v189, 7
    %v191 = vsub.s32 1, %v190
    %v192 = vrot.slane %v148, %v191
    %v193 = vmul.f32 %v179, %v188
    %v194 = vmul.f32 %v179, %v192
    %v195 = vmul.f32 %v183, %v188
    %v196 = vmul.f32 %v183, %v192
    %v197 = vadd.f32 %v173, %v193
    %v198 = vadd.f32 %v174, %v194
    %v199 = vadd.f32 %v175, %v195
    %v200 = vadd.f32 %v176, %v196
    %201 = vset.pattern.permute.xlu0 2
    %202 = vperm.xlu0 %201, %v149
    %v203 = vpop.permute.xlu0 %202
    %205 = vset.pattern.permute.xlu0 2
    %206 = vperm.xlu0 %205, %v150
    %v207 = vpop.permute.xlu0 %206
    %v209 = vlaneseq
    %v210 = vshrl.u32 %v209, 7
    %v211 = vsub.s32 2, %v210
    %v212 = vrot.slane %v147, %v211
    %v213 = vlaneseq
    %v214 = vshrl.u32 %v213, 7
    %v215 = vsub.s32 2, %v214
    %v216 = vrot.slane %v148, %v215
    %v217 = vmul.f32 %v203, %v212
    %v218 = vmul.f32 %v203, %v216
    %v219 = vmul.f32 %v207, %v212
    %v220 = vmul.f32 %v207, %v216
    %v221 = vadd.f32 %v197, %v217
    %v222 = vadd.f32 %v198, %v218
    %v223 = vadd.f32 %v199, %v219
    %v224 = vadd.f32 %v200, %v220
    %225 = vset.pattern.permute.xlu0 3
    %226 = vperm.xlu0 %225, %v149
    %v227 = vpop.permute.xlu0 %226
    %229 = vset.pattern.permute.xlu0 3
    %230 = vperm.xlu0 %229, %v150
    %v231 = vpop.permute.xlu0 %230
    %v233 = vlaneseq
    %v234 = vshrl.u32 %v233, 7
    %v235 = vsub.s32 3, %v234
    %v236 = vrot.slane %v147, %v235
    %v237 = vlaneseq
    %v238 = vshrl.u32 %v237, 7
    %v239 = vsub.s32 3, %v238
    %v240 = vrot.slane %v148, %v239
    %v241 = vmul.f32 %v227, %v236
    %v242 = vmul.f32 %v227, %v240
    %v243 = vmul.f32 %v231, %v236
    %v244 = vmul.f32 %v231, %v240
    %v245 = vadd.f32 %v221, %v241
    %v246 = vadd.f32 %v222, %v242
    %v247 = vadd.f32 %v223, %v243
    %v248 = vadd.f32 %v224, %v244
    %249 = vset.pattern.permute.xlu0 4
    %250 = vperm.xlu0 %249, %v149
    %v251 = vpop.permute.xlu0 %250
    %253 = vset.pattern.permute.xlu0 4
    %254 = vperm.xlu0 %253, %v150
    %v255 = vpop.permute.xlu0 %254
    %v257 = vlaneseq
    %v258 = vshrl.u32 %v257, 7
    %v259 = vsub.s32 4, %v258
    %v260 = vrot.slane %v147, %v259
    %v261 = vlaneseq
    %v262 = vshrl.u32 %v261, 7
    %v263 = vsub.s32 4, %v262
    %v264 = vrot.slane %v148, %v263
    %v265 = vmul.f32 %v251, %v260
    %v266 = vmul.f32 %v251, %v264
    %v267 = vmul.f32 %v255, %v260
    %v268 = vmul.f32 %v255, %v264
    %v269 = vadd.f32 %v245, %v265
    %v270 = vadd.f32 %v246, %v266
    %v271 = vadd.f32 %v247, %v267
    %v272 = vadd.f32 %v248, %v268
    %273 = vset.pattern.permute.xlu0 5
    %274 = vperm.xlu0 %273, %v149
    %v275 = vpop.permute.xlu0 %274
    %277 = vset.pattern.permute.xlu0 5
    %278 = vperm.xlu0 %277, %v150
    %v279 = vpop.permute.xlu0 %278
    %v281 = vlaneseq
    %v282 = vshrl.u32 %v281, 7
    %v283 = vsub.s32 5, %v282
    %v284 = vrot.slane %v147, %v283
    %v285 = vlaneseq
    %v286 = vshrl.u32 %v285, 7
    %v287 = vsub.s32 5, %v286
    %v288 = vrot.slane %v148, %v287
    %v289 = vmul.f32 %v275, %v284
    %v290 = vmul.f32 %v275, %v288
    %v291 = vmul.f32 %v279, %v284
    %v292 = vmul.f32 %v279, %v288
    %v293 = vadd.f32 %v269, %v289
    %v294 = vadd.f32 %v270, %v290
    %v295 = vadd.f32 %v271, %v291
    %v296 = vadd.f32 %v272, %v292
    %297 = vset.pattern.permute.xlu0 6
    %298 = vperm.xlu0 %297, %v149
    %v299 = vpop.permute.xlu0 %298
    %301 = vset.pattern.permute.xlu0 6
    %302 = vperm.xlu0 %301, %v150
    %v303 = vpop.permute.xlu0 %302
    %v305 = vlaneseq
    %v306 = vshrl.u32 %v305, 7
    %v307 = vsub.s32 6, %v306
    %v308 = vrot.slane %v147, %v307
    %v309 = vlaneseq
    %v310 = vshrl.u32 %v309, 7
    %v311 = vsub.s32 6, %v310
    %v312 = vrot.slane %v148, %v311
    %v313 = vmul.f32 %v299, %v308
    %v314 = vmul.f32 %v299, %v312
    %v315 = vmul.f32 %v303, %v308
    %v316 = vmul.f32 %v303, %v312
    %v317 = vadd.f32 %v293, %v313
    %v318 = vadd.f32 %v294, %v314
    %v319 = vadd.f32 %v295, %v315
    %v320 = vadd.f32 %v296, %v316
    %321 = vset.pattern.permute.xlu0 7
    %322 = vperm.xlu0 %321, %v149
    %v323 = vpop.permute.xlu0 %322
    %325 = vset.pattern.permute.xlu0 7
    %326 = vperm.xlu0 %325, %v150
    %v327 = vpop.permute.xlu0 %326
    %v329 = vlaneseq
    %v330 = vshrl.u32 %v329, 7
    %v331 = vsub.s32 7, %v330
    %v332 = vrot.slane %v147, %v331
    %v333 = vlaneseq
    %v334 = vshrl.u32 %v333, 7
    %v335 = vsub.s32 7, %v334
    %v336 = vrot.slane %v148, %v335
    %v337 = vmul.f32 %v323, %v332
    %v338 = vmul.f32 %v323, %v336
    %v339 = vmul.f32 %v327, %v332
    %v340 = vmul.f32 %v327, %v336
    %v341 = vadd.f32 %v317, %v337
    %v342 = vadd.f32 %v318, %v338
    %v343 = vadd.f32 %v319, %v339
    %v344 = vadd.f32 %v320, %v340
    %345 = vst [vmem:[#allocation5] sm:$0xff] %v341
    %346 = vst [vmem:[#allocation5 + $0x8] sm:$0xff] %v342
    %347 = vst [vmem:[#allocation5 + $0x10] sm:$0xff] %v343
    %348 = vst [vmem:[#allocation5 + $0x18] sm:$0xff] %v344
    // Predicated region
    $region18: #{tpu_custom_call.1} parent=1 // pred_check
      _
    $region19: #{tpu_custom_call.1} parent=1 // pred_check_branch
      %350 = sbr.rel (0) target = $region21
    $region20: #{tpu_custom_call.1} parent=1 // pred_region
      %s352 = ssub.s32 512, 512
      %353 = vsyncadd [#allocation4], %s352
      %s354 = sshll.u32 [#allocation5], 4
      %s355 = int_to_ptr.vmem [resolvable:$true] %s354
      %360 = dma.vmem_to_hbm [thread:$0]  %s355, 512, %s3, [#allocation4], 256, 256, 16
    $region21: #{tpu_custom_call.1} parent=1 // pred_fallthru
      _
    // Predicated region
    $region22: #{tpu_custom_call.1} parent=1 // pred_check
      _
    $region23: #{tpu_custom_call.1} parent=1 // pred_check_branch
      %362 = sbr.rel (0) target = $region25
    $region24: #{tpu_custom_call.1} parent=1 // pred_region
      %363 = dma.done [#allocation4], 512
    $region25: #{tpu_custom_call.1} parent=1 // pred_fallthru
      _
    %364 = vsyncpa [#allocation3], 1
    %365 = vsyncpa [#allocation4], 1

</llo_original>
